<compile_context>
chip_gen: v7x
topology: tpu7x:2x2x1
jax: 0.10.0
libtpu: 0.0.40
codegen_flags: <defaults>
</compile_context>

<pallas_src>
import math

import jax
import jax.numpy as jnp
import numpy as np
from jax.experimental import pallas as pl
from jax.experimental.pallas import tpu as pltpu

# ----------------------------- model dims -----------------------------------
B = 2            # batch
S = 8            # sequence length
D = 32           # d_model
H = 4            # num_heads
DK = D // H      # head dim
DFF = 64         # feed-forward hidden
N = B * S        # flattened rows handled in one kernel invocation
EPS = 1e-5       # nn.LayerNorm default eps

# ---- packed bf16 weight slab row offsets (cols padded to 3*D = 96) ----
W_QKV = 0                # rows [0, D)        cols [0, 3*D)
W_O = D                  # rows [D, 2D)       cols [0, D)
W_1 = 2 * D              # rows [2D, 3D)      cols [0, DFF)
W_2 = 3 * D              # rows [3D, 3D+DFF)  cols [0, D)
W_ROWS = 3 * D + DFF     # 160
W_COLS = 3 * D           # 96

# ---- packed f32 param slab row offsets (cols padded to 3*D = 96) ----
ROW_MASK = 0             # rows [0, N) cols [0, N): block-diagonal -1e9 mask
ROW_BQKV = N
ROW_B1 = N + 1
ROW_BO = N + 2
ROW_G1 = N + 3
ROW_BE1 = N + 4
ROW_B2 = N + 5
ROW_G2 = N + 6
ROW_BE2 = N + 7
P_ROWS = N + 8           # 24
P_COLS = 3 * D           # 96


def _layer_norm(x, gamma, beta):
    """f32 LayerNorm over the last axis (biased variance, eps inside sqrt)."""
    mean = jnp.mean(x, axis=-1, keepdims=True)
    var = jnp.mean((x - mean) ** 2, axis=-1, keepdims=True)
    return (x - mean) * jax.lax.rsqrt(var + EPS) * gamma + beta


def transformer_block_kernel(x_ref, w_ref, p_ref, o_ref):
    x = x_ref[...]                                    # (N, D) f32 residual path
    x_bf = x.astype(jnp.bfloat16)

    # ---- static slices out of the two packed slabs ----
    wqkv = w_ref[W_QKV:W_QKV + D, 0:3 * D]            # (D, 3D) bf16, 1/sqrt(DK) folded into Q block
    wo = w_ref[W_O:W_O + D, 0:D]                      # (D, D)  bf16
    w1 = w_ref[W_1:W_1 + D, 0:DFF]                    # (D, DFF) bf16
    w2 = w_ref[W_2:W_2 + DFF, 0:D]                    # (DFF, D) bf16

    mask = p_ref[ROW_MASK:ROW_MASK + N, 0:N]          # (N, N) f32, block-diagonal 0 / -1e9
    bqkv = p_ref[ROW_BQKV:ROW_BQKV + 1, 0:3 * D]      # (1, 3D)
    b1 = p_ref[ROW_B1:ROW_B1 + 1, 0:DFF]
    bo = p_ref[ROW_BO:ROW_BO + 1, 0:D]
    g1 = p_ref[ROW_G1:ROW_G1 + 1, 0:D]
    be1 = p_ref[ROW_BE1:ROW_BE1 + 1, 0:D]
    b2 = p_ref[ROW_B2:ROW_B2 + 1, 0:D]
    g2 = p_ref[ROW_G2:ROW_G2 + 1, 0:D]
    be2 = p_ref[ROW_BE2:ROW_BE2 + 1, 0:D]

    # ---- fused QKV projection: single (N, D) @ (D, 3D) MXU matmul ----
    qkv = jnp.dot(x_bf, wqkv, preferred_element_type=jnp.float32) + bqkv   # (N, 3D) f32
    q2d = qkv[:, 0:D].astype(jnp.bfloat16)
    k2d = qkv[:, D:2 * D].astype(jnp.bfloat16)
    v2d = qkv[:, 2 * D:3 * D].astype(jnp.bfloat16)

    # split heads: lane slices stacked on a new leading head axis (cheap relayout)
    q = jnp.stack([q2d[:, h * DK:(h + 1) * DK] for h in range(H)], axis=0)  # (H, N, DK)
    k = jnp.stack([k2d[:, h * DK:(h + 1) * DK] for h in range(H)], axis=0)
    v = jnp.stack([v2d[:, h * DK:(h + 1) * DK] for h in range(H)], axis=0)

    # ---- attention scores, heads batched; K^T folded into the contraction ----
    s = jnp.einsum("hqd,hkd->hqk", q, k, preferred_element_type=jnp.float32)  # (H, N, N)
    # precomputed block-diagonal mask keeps the flattened batch elements independent
    s = s + mask

    # ---- softmax (f32); reciprocal on the EUP instead of a VALU divide ----
    s = s - jnp.max(s, axis=-1, keepdims=True)
    probs = jnp.exp(s)
    probs = probs * pl.reciprocal(jnp.sum(probs, axis=-1, keepdims=True), approx=True)

    o = jnp.einsum("hqk,hkd->hqd", probs.astype(jnp.bfloat16), v,
                   preferred_element_type=jnp.float32)                        # (H, N, DK)

    # ---- output projection: heads concatenated back to lanes, one K=D matmul ----
    attn2d = jnp.concatenate([o[h] for h in range(H)], axis=-1)               # (N, D) f32
    attn = jnp.dot(attn2d.astype(jnp.bfloat16), wo,
                   preferred_element_type=jnp.float32) + bo                   # (N, D)

    # ---- residual + LayerNorm 1 (f32) ----
    x1 = _layer_norm(x + attn, g1, be1)

    # ---- feed-forward (bf16 MXU operands, f32 accumulation) ----
    hdn = jnp.dot(x1.astype(jnp.bfloat16), w1, preferred_element_type=jnp.float32) + b1
    hdn = jnp.maximum(hdn, 0.0)
    ff = jnp.dot(hdn.astype(jnp.bfloat16), w2, preferred_element_type=jnp.float32) + b2

    # ---- residual + LayerNorm 2 ----
    x2 = _layer_norm(x1 + ff, g2, be2)

    # D=32 (<128 lanes) => masked partial stores unavoidable for this layer size alone.
    o_ref[...] = x2.astype(o_ref.dtype)


def transformer_block(x, w_slab, p_slab):
    """x: (B, S, D) float32. w_slab/p_slab from pack_params()."""
    x2d = x.reshape(N, D)

    flops = (2 * N * D * (3 * D)          # fused QKV
             + 2 * H * N * N * DK * 2     # scores + P@V
             + 2 * N * D * D              # output projection
             + 2 * N * D * DFF * 2)       # FFN
    transcendentals = H * N * N + H * N + 2 * N   # exp + reciprocal + rsqrt
    bytes_accessed = (x2d.size * 4 + w_slab.size * 2 + p_slab.size * 4 + N * D * 4)

    out2d = pl.pallas_call(
        transformer_block_kernel,
        out_shape=jax.ShapeDtypeStruct((N, D), jnp.float32),
        # Gridless: whole problem in one invocation, every operand fully VMEM-resident,
        # no pipelining bookkeeping (3 input DMAs + 1 output DMA total).
        in_specs=[pl.BlockSpec(memory_space=pltpu.MemorySpace.VMEM)] * 3,
        out_specs=pl.BlockSpec(memory_space=pltpu.MemorySpace.VMEM),
        cost_estimate=pl.CostEstimate(flops=flops,
                                      transcendentals=transcendentals,
                                      bytes_accessed=bytes_accessed),
    )(x2d, w_slab, p_slab)
    return out2d.reshape(B, S, D)


def make_params(key):
    """PyTorch-layout parameters: Linear weights as (in, out), biases (1, out)."""
    ks = jax.random.split(key, 8)
    scale = 0.02
    return {
        "wq": jax.random.normal(ks[0], (D, D), jnp.float32) * scale,
        "bq": jnp.zeros((1, D), jnp.float32),
        "wk": jax.random.normal(ks[1], (D, D), jnp.float32) * scale,
        "bk": jnp.zeros((1, D), jnp.float32),
        "wv": jax.random.normal(ks[2], (D, D), jnp.float32) * scale,
        "bv": jnp.zeros((1, D), jnp.float32),
        "wo": jax.random.normal(ks[3], (D, D), jnp.float32) * scale,
        "bo": jax.random.normal(ks[4], (1, D), jnp.float32) * scale,
        "g1": jnp.ones((1, D), jnp.float32),
        "be1": jnp.zeros((1, D), jnp.float32),
        "w1": jax.random.normal(ks[5], (D, DFF), jnp.float32) * scale,
        "b1": jax.random.normal(ks[6], (1, DFF), jnp.float32) * scale,
        "w2": jax.random.normal(ks[7], (DFF, D), jnp.float32) * scale,
        "b2": jnp.zeros((1, D), jnp.float32),
        "g2": jnp.ones((1, D), jnp.float32),
        "be2": jnp.zeros((1, D), jnp.float32),
    }


def pack_params(p):
    """One-time host-side packing:
       * fuse Q/K/V into a single (D, 3D) weight (1/sqrt(DK) folded into the Q block),
       * pack all MXU weights into ONE bf16 slab,
       * pack the static block-diagonal mask + all biases + LN params into ONE f32 slab."""
    scale = 1.0 / math.sqrt(DK)

    w_slab = np.zeros((W_ROWS, W_COLS), np.float32)
    w_slab[W_QKV:W_QKV + D, 0:3 * D] = np.concatenate(
        [np.asarray(p["wq"]) * scale, np.asarray(p["wk"]), np.asarray(p["wv"])], axis=1)
    w_slab[W_O:W_O + D, 0:D] = np.asarray(p["wo"])
    w_slab[W_1:W_1 + D, 0:DFF] = np.asarray(p["w1"])
    w_slab[W_2:W_2 + DFF, 0:D] = np.asarray(p["w2"])

    p_slab = np.zeros((P_ROWS, P_COLS), np.float32)
    row_b = np.arange(N)[:, None] // S
    col_b = np.arange(N)[None, :] // S
    p_slab[ROW_MASK:ROW_MASK + N, 0:N] = np.where(row_b == col_b, 0.0, -1e9)
    p_slab[ROW_BQKV, 0:3 * D] = np.concatenate(
        [np.asarray(p["bq"]) * scale, np.asarray(p["bk"]), np.asarray(p["bv"])], axis=1)[0]
    p_slab[ROW_B1, 0:DFF] = np.asarray(p["b1"])[0]
    p_slab[ROW_BO, 0:D] = np.asarray(p["bo"])[0]
    p_slab[ROW_G1, 0:D] = np.asarray(p["g1"])[0]
    p_slab[ROW_BE1, 0:D] = np.asarray(p["be1"])[0]
    p_slab[ROW_B2, 0:D] = np.asarray(p["b2"])[0]
    p_slab[ROW_G2, 0:D] = np.asarray(p["g2"])[0]
    p_slab[ROW_BE2, 0:D] = np.asarray(p["be2"])[0]

    return jnp.asarray(w_slab, jnp.bfloat16), jnp.asarray(p_slab, jnp.float32)


def reference_forward(x, p):
    """Pure-JAX f32 reference mirroring the PyTorch module (eval mode)."""
    def ln(v, g, b):
        m = jnp.mean(v, axis=-1, keepdims=True)
        var = jnp.mean((v - m) ** 2, axis=-1, keepdims=True)
        return (v - m) / jnp.sqrt(var + EPS) * g + b

    q = x @ p["wq"] + p["bq"]
    k = x @ p["wk"] + p["bk"]
    v = x @ p["wv"] + p["bv"]
    q = q.reshape(B, S, H, DK).transpose(0, 2, 1, 3)
    k = k.reshape(B, S, H, DK).transpose(0, 2, 1, 3)
    v = v.reshape(B, S, H, DK).transpose(0, 2, 1, 3)
    scores = jnp.einsum("bhqd,bhkd->bhqk", q, k) / math.sqrt(DK)
    w = jax.nn.softmax(scores, axis=-1)
    attn = jnp.einsum("bhqk,bhkd->bhqd", w, v).transpose(0, 2, 1, 3).reshape(B, S, D)
    attn = attn @ p["wo"] + p["bo"]
    x1 = ln(x + attn, p["g1"], p["be1"])
    ff = jnp.maximum(x1 @ p["w1"] + p["b1"], 0.0) @ p["w2"] + p["b2"]
    return ln(x1 + ff, p["g2"], p["be2"])


if __name__ == "__main__":
    key = jax.random.PRNGKey(0)
    kx, kp = jax.random.split(key)
    x = jax.random.normal(kx, (B, S, D), jnp.float32)
    params = make_params(kp)
    w_slab, p_slab = pack_params(params)

    out = jax.block_until_ready(transformer_block(x, w_slab, p_slab))
    ref = jax.block_until_ready(reference_forward(x, params))

    # Kernel uses bf16 MXU operands with f32 accumulation and an approx reciprocal in
    # the softmax; compare against the f32 reference at a bf16-appropriate tolerance.
    np.testing.assert_allclose(np.asarray(out), np.asarray(ref), rtol=2e-2, atol=2e-2)

    print("KERNEL_OK")
</pallas_src>

<mosaic_0001>
module attributes {stable_mosaic.version = 11 : i64} {
  func.func @transformer_block_kernel(%arg0: memref<16x32xf32, #tpu.memory_space<vmem>>, %arg1: memref<160x96xbf16, #tpu.memory_space<vmem>>, %arg2: memref<24x96xf32, #tpu.memory_space<vmem>>, %arg3: memref<16x32xf32, #tpu.memory_space<vmem>>) attributes {dimension_semantics = [], scalar_prefetch = 0 : i64, scratch_operands = 0 : i64, tpu.core_type = #tpu.core_type<tc>} {
    %c0 = arith.constant 0 : index
    %c0_0 = arith.constant 0 : index
    %0 = vector.load %arg0[%c0, %c0_0] : memref<16x32xf32, #tpu.memory_space<vmem>>, vector<16x32xf32>
    %1 = arith.truncf %0 : vector<16x32xf32> to vector<16x32xbf16>
    %c0_1 = arith.constant 0 : index
    %c0_2 = arith.constant 0 : index
    %2 = vector.load %arg1[%c0_1, %c0_2] : memref<160x96xbf16, #tpu.memory_space<vmem>>, vector<32x96xbf16>
    %c32 = arith.constant 32 : index
    %c0_3 = arith.constant 0 : index
    %3 = vector.load %arg1[%c32, %c0_3] : memref<160x96xbf16, #tpu.memory_space<vmem>>, vector<32x32xbf16>
    %c64 = arith.constant 64 : index
    %c0_4 = arith.constant 0 : index
    %4 = vector.load %arg1[%c64, %c0_4] : memref<160x96xbf16, #tpu.memory_space<vmem>>, vector<32x64xbf16>
    %c96 = arith.constant 96 : index
    %c0_5 = arith.constant 0 : index
    %5 = vector.load %arg1[%c96, %c0_5] : memref<160x96xbf16, #tpu.memory_space<vmem>>, vector<64x32xbf16>
    %c0_6 = arith.constant 0 : index
    %c0_7 = arith.constant 0 : index
    %6 = vector.load %arg2[%c0_6, %c0_7] : memref<24x96xf32, #tpu.memory_space<vmem>>, vector<16x16xf32>
    %c16 = arith.constant 16 : index
    %c0_8 = arith.constant 0 : index
    %7 = vector.load %arg2[%c16, %c0_8] : memref<24x96xf32, #tpu.memory_space<vmem>>, vector<1x96xf32>
    %c17 = arith.constant 17 : index
    %c0_9 = arith.constant 0 : index
    %8 = vector.load %arg2[%c17, %c0_9] : memref<24x96xf32, #tpu.memory_space<vmem>>, vector<1x64xf32>
    %c18 = arith.constant 18 : index
    %c0_10 = arith.constant 0 : index
    %9 = vector.load %arg2[%c18, %c0_10] : memref<24x96xf32, #tpu.memory_space<vmem>>, vector<1x32xf32>
    %c19 = arith.constant 19 : index
    %c0_11 = arith.constant 0 : index
    %10 = vector.load %arg2[%c19, %c0_11] : memref<24x96xf32, #tpu.memory_space<vmem>>, vector<1x32xf32>
    %c20 = arith.constant 20 : index
    %c0_12 = arith.constant 0 : index
    %11 = vector.load %arg2[%c20, %c0_12] : memref<24x96xf32, #tpu.memory_space<vmem>>, vector<1x32xf32>
    %c21 = arith.constant 21 : index
    %c0_13 = arith.constant 0 : index
    %12 = vector.load %arg2[%c21, %c0_13] : memref<24x96xf32, #tpu.memory_space<vmem>>, vector<1x32xf32>
    %c22 = arith.constant 22 : index
    %c0_14 = arith.constant 0 : index
    %13 = vector.load %arg2[%c22, %c0_14] : memref<24x96xf32, #tpu.memory_space<vmem>>, vector<1x32xf32>
    %c23 = arith.constant 23 : index
    %c0_15 = arith.constant 0 : index
    %14 = vector.load %arg2[%c23, %c0_15] : memref<24x96xf32, #tpu.memory_space<vmem>>, vector<1x32xf32>
    %cst = arith.constant dense<0.000000e+00> : vector<16x96xf32>
    %15 = tpu.matmul %1, %2, %cst {dimension_numbers = #tpu.dot_dimension_numbers<[1], [0], [0], [1], [0, 0, 1, 1], [], []>} : vector<16x32xbf16>, vector<32x96xbf16>, vector<16x96xf32> -> vector<16x96xf32>
    %16 = vector.broadcast %7 : vector<1x96xf32> to vector<16x96xf32>
    %17 = arith.addf %15, %16 : vector<16x96xf32>
    %18 = vector.extract_strided_slice %17 {offsets = [0, 0], sizes = [16, 32], strides = [1, 1]} : vector<16x96xf32> to vector<16x32xf32>
    %19 = arith.truncf %18 : vector<16x32xf32> to vector<16x32xbf16>
    %20 = vector.extract_strided_slice %17 {offsets = [0, 32], sizes = [16, 32], strides = [1, 1]} : vector<16x96xf32> to vector<16x32xf32>
    %21 = arith.truncf %20 : vector<16x32xf32> to vector<16x32xbf16>
    %22 = vector.extract_strided_slice %17 {offsets = [0, 64], sizes = [16, 32], strides = [1, 1]} : vector<16x96xf32> to vector<16x32xf32>
    %23 = arith.truncf %22 : vector<16x32xf32> to vector<16x32xbf16>
    %24 = vector.extract_strided_slice %19 {offsets = [0, 0], sizes = [16, 8], strides = [1, 1]} : vector<16x32xbf16> to vector<16x8xbf16>
    %25 = vector.extract_strided_slice %19 {offsets = [0, 8], sizes = [16, 8], strides = [1, 1]} : vector<16x32xbf16> to vector<16x8xbf16>
    %26 = vector.extract_strided_slice %19 {offsets = [0, 16], sizes = [16, 8], strides = [1, 1]} : vector<16x32xbf16> to vector<16x8xbf16>
    %27 = vector.extract_strided_slice %19 {offsets = [0, 24], sizes = [16, 8], strides = [1, 1]} : vector<16x32xbf16> to vector<16x8xbf16>
    %28 = vector.shape_cast %24 : vector<16x8xbf16> to vector<1x16x8xbf16>
    %29 = vector.shape_cast %25 : vector<16x8xbf16> to vector<1x16x8xbf16>
    %30 = vector.shape_cast %26 : vector<16x8xbf16> to vector<1x16x8xbf16>
    %31 = vector.shape_cast %27 : vector<16x8xbf16> to vector<1x16x8xbf16>
    %32 = tpu.concatenate %28, %29, %30, %31 in 0 : vector<1x16x8xbf16>, vector<1x16x8xbf16>, vector<1x16x8xbf16>, vector<1x16x8xbf16> -> vector<4x16x8xbf16>
    %33 = vector.extract_strided_slice %21 {offsets = [0, 0], sizes = [16, 8], strides = [1, 1]} : vector<16x32xbf16> to vector<16x8xbf16>
    %34 = vector.extract_strided_slice %21 {offsets = [0, 8], sizes = [16, 8], strides = [1, 1]} : vector<16x32xbf16> to vector<16x8xbf16>
    %35 = vector.extract_strided_slice %21 {offsets = [0, 16], sizes = [16, 8], strides = [1, 1]} : vector<16x32xbf16> to vector<16x8xbf16>
    %36 = vector.extract_strided_slice %21 {offsets = [0, 24], sizes = [16, 8], strides = [1, 1]} : vector<16x32xbf16> to vector<16x8xbf16>
    %37 = vector.shape_cast %33 : vector<16x8xbf16> to vector<1x16x8xbf16>
    %38 = vector.shape_cast %34 : vector<16x8xbf16> to vector<1x16x8xbf16>
    %39 = vector.shape_cast %35 : vector<16x8xbf16> to vector<1x16x8xbf16>
    %40 = vector.shape_cast %36 : vector<16x8xbf16> to vector<1x16x8xbf16>
    %41 = tpu.concatenate %37, %38, %39, %40 in 0 : vector<1x16x8xbf16>, vector<1x16x8xbf16>, vector<1x16x8xbf16>, vector<1x16x8xbf16> -> vector<4x16x8xbf16>
    %42 = vector.extract_strided_slice %23 {offsets = [0, 0], sizes = [16, 8], strides = [1, 1]} : vector<16x32xbf16> to vector<16x8xbf16>
    %43 = vector.extract_strided_slice %23 {offsets = [0, 8], sizes = [16, 8], strides = [1, 1]} : vector<16x32xbf16> to vector<16x8xbf16>
    %44 = vector.extract_strided_slice %23 {offsets = [0, 16], sizes = [16, 8], strides = [1, 1]} : vector<16x32xbf16> to vector<16x8xbf16>
    %45 = vector.extract_strided_slice %23 {offsets = [0, 24], sizes = [16, 8], strides = [1, 1]} : vector<16x32xbf16> to vector<16x8xbf16>
    %46 = vector.shape_cast %42 : vector<16x8xbf16> to vector<1x16x8xbf16>
    %47 = vector.shape_cast %43 : vector<16x8xbf16> to vector<1x16x8xbf16>
    %48 = vector.shape_cast %44 : vector<16x8xbf16> to vector<1x16x8xbf16>
    %49 = vector.shape_cast %45 : vector<16x8xbf16> to vector<1x16x8xbf16>
    %50 = tpu.concatenate %46, %47, %48, %49 in 0 : vector<1x16x8xbf16>, vector<1x16x8xbf16>, vector<1x16x8xbf16>, vector<1x16x8xbf16> -> vector<4x16x8xbf16>
    "tpu.trace_start"() <{level = 10 : i32, message = "hqd,hkd->hqk"}> : () -> ()
    %cst_16 = arith.constant dense<0.000000e+00> : vector<4x16x16xf32>
    %51 = tpu.matmul %32, %41, %cst_16 {dimension_numbers = #tpu.dot_dimension_numbers<[2], [2], [1], [1], [0, 0, 0, 1, 1, 1], [0], [0]>} : vector<4x16x8xbf16>, vector<4x16x8xbf16>, vector<4x16x16xf32> -> vector<4x16x16xf32>
    "tpu.trace_stop"() : () -> ()
    %52 = vector.shape_cast %6 : vector<16x16xf32> to vector<1x16x16xf32>
    %53 = vector.broadcast %52 : vector<1x16x16xf32> to vector<4x16x16xf32>
    %54 = arith.addf %51, %53 : vector<4x16x16xf32>
    %cst_17 = arith.constant dense<0xFF800000> : vector<4x16xf32>
    %55 = vector.multi_reduction <maximumf>, %54, %cst_17 [2] : vector<4x16x16xf32> to vector<4x16xf32>
    %56 = vector.shape_cast %55 : vector<4x16xf32> to vector<4x16x1xf32>
    %57 = vector.broadcast %56 : vector<4x16x1xf32> to vector<4x16x16xf32>
    %58 = arith.subf %54, %57 : vector<4x16x16xf32>
    %59 = math.exp %58 : vector<4x16x16xf32>
    %cst_18 = arith.constant dense<0.000000e+00> : vector<4x16xf32>
    %60 = vector.multi_reduction <add>, %59, %cst_18 [2] : vector<4x16x16xf32> to vector<4x16xf32>
    %61 = vector.shape_cast %60 : vector<4x16xf32> to vector<4x16x1xf32>
    %62 = tpu.reciprocal %61 {approx = true} : vector<4x16x1xf32> -> vector<4x16x1xf32>
    %63 = vector.broadcast %62 : vector<4x16x1xf32> to vector<4x16x16xf32>
    %64 = arith.mulf %59, %63 : vector<4x16x16xf32>
    %65 = arith.truncf %64 : vector<4x16x16xf32> to vector<4x16x16xbf16>
    "tpu.trace_start"() <{level = 10 : i32, message = "hqk,hkd->hqd"}> : () -> ()
    %cst_19 = arith.constant dense<0.000000e+00> : vector<4x16x8xf32>
    %66 = tpu.matmul %65, %50, %cst_19 {dimension_numbers = #tpu.dot_dimension_numbers<[2], [1], [1], [2], [0, 0, 0, 1, 1, 2], [0], [0]>} : vector<4x16x16xbf16>, vector<4x16x8xbf16>, vector<4x16x8xf32> -> vector<4x16x8xf32>
    "tpu.trace_stop"() : () -> ()
    %67 = vector.extract_strided_slice %66 {offsets = [0, 0, 0], sizes = [1, 16, 8], strides = [1, 1, 1]} : vector<4x16x8xf32> to vector<1x16x8xf32>
    %68 = vector.shape_cast %67 : vector<1x16x8xf32> to vector<16x8xf32>
    %69 = vector.extract_strided_slice %66 {offsets = [1, 0, 0], sizes = [1, 16, 8], strides = [1, 1, 1]} : vector<4x16x8xf32> to vector<1x16x8xf32>
    %70 = vector.shape_cast %69 : vector<1x16x8xf32> to vector<16x8xf32>
    %71 = vector.extract_strided_slice %66 {offsets = [2, 0, 0], sizes = [1, 16, 8], strides = [1, 1, 1]} : vector<4x16x8xf32> to vector<1x16x8xf32>
    %72 = vector.shape_cast %71 : vector<1x16x8xf32> to vector<16x8xf32>
    %73 = vector.extract_strided_slice %66 {offsets = [3, 0, 0], sizes = [1, 16, 8], strides = [1, 1, 1]} : vector<4x16x8xf32> to vector<1x16x8xf32>
    %74 = vector.shape_cast %73 : vector<1x16x8xf32> to vector<16x8xf32>
    %75 = tpu.concatenate %68, %70, %72, %74 in 1 : vector<16x8xf32>, vector<16x8xf32>, vector<16x8xf32>, vector<16x8xf32> -> vector<16x32xf32>
    %76 = arith.truncf %75 : vector<16x32xf32> to vector<16x32xbf16>
    %cst_20 = arith.constant dense<0.000000e+00> : vector<16x32xf32>
    %77 = tpu.matmul %76, %3, %cst_20 {dimension_numbers = #tpu.dot_dimension_numbers<[1], [0], [0], [1], [0, 0, 1, 1], [], []>} : vector<16x32xbf16>, vector<32x32xbf16>, vector<16x32xf32> -> vector<16x32xf32>
    %78 = vector.broadcast %9 : vector<1x32xf32> to vector<16x32xf32>
    %79 = arith.addf %77, %78 : vector<16x32xf32>
    %80 = arith.addf %0, %79 : vector<16x32xf32>
    %cst_21 = arith.constant dense<0.000000e+00> : vector<16xf32>
    %81 = vector.multi_reduction <add>, %80, %cst_21 [1] : vector<16x32xf32> to vector<16xf32>
    %82 = vector.shape_cast %81 : vector<16xf32> to vector<16x1xf32>
    %cst_22 = arith.constant 3.200000e+01 : f32
    %83 = vector.broadcast %cst_22 : f32 to vector<16x1xf32>
    %84 = arith.divf %82, %83 : vector<16x1xf32>
    %85 = vector.broadcast %84 : vector<16x1xf32> to vector<16x32xf32>
    %86 = arith.subf %80, %85 : vector<16x32xf32>
    %87 = arith.mulf %86, %86 : vector<16x32xf32>
    %cst_23 = arith.constant dense<0.000000e+00> : vector<16xf32>
    %88 = vector.multi_reduction <add>, %87, %cst_23 [1] : vector<16x32xf32> to vector<16xf32>
    %89 = vector.shape_cast %88 : vector<16xf32> to vector<16x1xf32>
    %cst_24 = arith.constant 3.200000e+01 : f32
    %90 = vector.broadcast %cst_24 : f32 to vector<16x1xf32>
    %91 = arith.divf %89, %90 : vector<16x1xf32>
    %92 = vector.broadcast %84 : vector<16x1xf32> to vector<16x32xf32>
    %93 = arith.subf %80, %92 : vector<16x32xf32>
    %cst_25 = arith.constant 9.99999974E-6 : f32
    %94 = vector.broadcast %cst_25 : f32 to vector<16x1xf32>
    %95 = arith.addf %91, %94 : vector<16x1xf32>
    %96 = math.rsqrt %95 : vector<16x1xf32>
    %97 = vector.broadcast %96 : vector<16x1xf32> to vector<16x32xf32>
    %98 = arith.mulf %93, %97 : vector<16x32xf32>
    %99 = vector.broadcast %10 : vector<1x32xf32> to vector<16x32xf32>
    %100 = arith.mulf %98, %99 : vector<16x32xf32>
    %101 = vector.broadcast %11 : vector<1x32xf32> to vector<16x32xf32>
    %102 = arith.addf %100, %101 : vector<16x32xf32>
    %103 = arith.truncf %102 : vector<16x32xf32> to vector<16x32xbf16>
    %cst_26 = arith.constant dense<0.000000e+00> : vector<16x64xf32>
    %104 = tpu.matmul %103, %4, %cst_26 {dimension_numbers = #tpu.dot_dimension_numbers<[1], [0], [0], [1], [0, 0, 1, 1], [], []>} : vector<16x32xbf16>, vector<32x64xbf16>, vector<16x64xf32> -> vector<16x64xf32>
    %105 = vector.broadcast %8 : vector<1x64xf32> to vector<16x64xf32>
    %106 = arith.addf %104, %105 : vector<16x64xf32>
    %cst_27 = arith.constant 0.000000e+00 : f32
    %107 = vector.broadcast %cst_27 : f32 to vector<16x64xf32>
    %108 = arith.maximumf %106, %107 : vector<16x64xf32>
    %109 = arith.truncf %108 : vector<16x64xf32> to vector<16x64xbf16>
    %cst_28 = arith.constant dense<0.000000e+00> : vector<16x32xf32>
    %110 = tpu.matmul %109, %5, %cst_28 {dimension_numbers = #tpu.dot_dimension_numbers<[1], [0], [0], [1], [0, 0, 1, 1], [], []>} : vector<16x64xbf16>, vector<64x32xbf16>, vector<16x32xf32> -> vector<16x32xf32>
    %111 = vector.broadcast %12 : vector<1x32xf32> to vector<16x32xf32>
    %112 = arith.addf %110, %111 : vector<16x32xf32>
    %113 = arith.addf %102, %112 : vector<16x32xf32>
    %cst_29 = arith.constant dense<0.000000e+00> : vector<16xf32>
    %114 = vector.multi_reduction <add>, %113, %cst_29 [1] : vector<16x32xf32> to vector<16xf32>
    %115 = vector.shape_cast %114 : vector<16xf32> to vector<16x1xf32>
    %cst_30 = arith.constant 3.200000e+01 : f32
    %116 = vector.broadcast %cst_30 : f32 to vector<16x1xf32>
    %117 = arith.divf %115, %116 : vector<16x1xf32>
    %118 = vector.broadcast %117 : vector<16x1xf32> to vector<16x32xf32>
    %119 = arith.subf %113, %118 : vector<16x32xf32>
    %120 = arith.mulf %119, %119 : vector<16x32xf32>
    %cst_31 = arith.constant dense<0.000000e+00> : vector<16xf32>
    %121 = vector.multi_reduction <add>, %120, %cst_31 [1] : vector<16x32xf32> to vector<16xf32>
    %122 = vector.shape_cast %121 : vector<16xf32> to vector<16x1xf32>
    %cst_32 = arith.constant 3.200000e+01 : f32
    %123 = vector.broadcast %cst_32 : f32 to vector<16x1xf32>
    %124 = arith.divf %122, %123 : vector<16x1xf32>
    %125 = vector.broadcast %117 : vector<16x1xf32> to vector<16x32xf32>
    %126 = arith.subf %113, %125 : vector<16x32xf32>
    %cst_33 = arith.constant 9.99999974E-6 : f32
    %127 = vector.broadcast %cst_33 : f32 to vector<16x1xf32>
    %128 = arith.addf %124, %127 : vector<16x1xf32>
    %129 = math.rsqrt %128 : vector<16x1xf32>
    %130 = vector.broadcast %129 : vector<16x1xf32> to vector<16x32xf32>
    %131 = arith.mulf %126, %130 : vector<16x32xf32>
    %132 = vector.broadcast %13 : vector<1x32xf32> to vector<16x32xf32>
    %133 = arith.mulf %131, %132 : vector<16x32xf32>
    %134 = vector.broadcast %14 : vector<1x32xf32> to vector<16x32xf32>
    %135 = arith.addf %133, %134 : vector<16x32xf32>
    %c0_34 = arith.constant 0 : index
    %c0_35 = arith.constant 0 : index
    %136 = vector.load %arg3[%c0_34, %c0_35] : memref<16x32xf32, #tpu.memory_space<vmem>>, vector<16x32xf32>
    tpu.vector_store %arg3[%c0_34, %c0_35], %135 {strides = array<i32>} : memref<16x32xf32, #tpu.memory_space<vmem>>, vector<16x32xf32>,
    return
  }
}

</mosaic_0001>

<llo_original>
// kernel: tpu_custom_call.1
$region0: #{tpu_custom_call.1}
  #allocation0 [shape = 'u32[]', space=smem, size = 0x4, offset = 0x4, fixed_abs, tag = 'smem constant byte address 0x4 - core index']
  #allocation1 [shape = 'u32[144,128]{1,0:T(1,128)}', space=vmem, size = 0x12000, scoped, tag = 'internal scratch']
  %s0 = inlined_call_operand.hbm [shape: f32[16,32], index: 0, kind: input, shape index: {}]
  %s1 = inlined_call_operand.hbm [shape: bf16[160,96], index: 1, kind: input, shape index: {}]
  %s2 = inlined_call_operand.hbm [shape: f32[24,96], index: 2, kind: input, shape index: {}]
  %s3 = inlined_call_operand.hbm [shape: f32[16,32], index: 3, kind: output, shape index: {}]
  %s4 = sld [smem:[#allocation0]]
  $region34: #{tpu_custom_call.1} parent=0
    _
  %s6 = ssub.s32 1, %s4
  %s7 = scalar_select 0, %s6, %s4
  $region1: #{tpu_custom_call.1} parent=0
    #allocation2 [shape = 'u8[8192]{0}', space=vmem, size = 0x2000, scoped, tag = 'input window, operand 0, single buffered']
    #allocation3 [shape = 's32[1]{0}', space=sflag, size = 0x4, scoped, tag = 'scoped memory for tpu_custom_call.1']
    #allocation4 [shape = 's32[1]{0}', space=sflag, size = 0x4, scoped, tag = 'scoped memory for tpu_custom_call.1']
    #allocation5 [shape = 'u8[40960]{0}', space=vmem, size = 0xa000, scoped, tag = 'input window, operand 1, single buffered']
    #allocation6 [shape = 's32[1]{0}', space=sflag, size = 0x4, scoped, tag = 'scoped memory for tpu_custom_call.1']
    #allocation7 [shape = 'u8[12288]{0}', space=vmem, size = 0x3000, scoped, tag = 'input window, operand 2, single buffered']
    #allocation8 [shape = 'u8[8192]{0}', space=vmem, size = 0x2000, scoped, tag = 'output window, operand 0, single buffered']
    %8 = vsyncpa [#allocation3], 0
    %9 = vsyncpa [#allocation6], 0
    %10 = vsyncpa [#allocation4], 0
    // Predicated region
    $region2: #{tpu_custom_call.1} parent=1 // pred_check
      _
    $region3: #{tpu_custom_call.1} parent=1 // pred_check_branch
      %12 = sbr.rel (0) target = $region5
    $region4: #{tpu_custom_call.1} parent=1 // pred_region
      %s14 = ssub.s32 256, 256
      %15 = vsyncadd [#allocation3], %s14
      %s16 = sshll.u32 [#allocation2], 4
      %s17 = int_to_ptr.vmem [resolvable:$true] %s16
      %22 = dma.hbm_to_vmem [thread:$0]  %s0, 256, %s17, [#allocation3], 128, 128, 8
    $region5: #{tpu_custom_call.1} parent=1 // pred_fallthru
      _
    // Predicated region
    $region6: #{tpu_custom_call.1} parent=1 // pred_check
      _
    $region7: #{tpu_custom_call.1} parent=1 // pred_check_branch
      %24 = sbr.rel (0) target = $region9
    $region8: #{tpu_custom_call.1} parent=1 // pred_region
      %s26 = ssub.s32 1280, 1280
      %27 = vsyncadd [#allocation6], %s26
      %s28 = sshll.u32 [#allocation5], 4
      %s29 = int_to_ptr.vmem [resolvable:$true] %s28
      %34 = dma.hbm_to_vmem [thread:$0]  %s1, 1280, %s29, [#allocation6], 64, 64, 4
    $region9: #{tpu_custom_call.1} parent=1 // pred_fallthru
      _
    // Predicated region
    $region10: #{tpu_custom_call.1} parent=1 // pred_check
      _
    $region11: #{tpu_custom_call.1} parent=1 // pred_check_branch
      %36 = sbr.rel (0) target = $region13
    $region12: #{tpu_custom_call.1} parent=1 // pred_region
      %s38 = ssub.s32 384, 384
      %39 = vsyncadd [#allocation6], %s38
      %s40 = sshll.u32 [#allocation7], 4
      %s41 = int_to_ptr.vmem [resolvable:$true] %s40
      %46 = dma.hbm_to_vmem [thread:$0]  %s2, 384, %s41, [#allocation6], 128, 128, 8
    $region13: #{tpu_custom_call.1} parent=1 // pred_fallthru
      _
    // Predicated region
    $region14: #{tpu_custom_call.1} parent=1 // pred_check
      _
    $region15: #{tpu_custom_call.1} parent=1 // pred_check_branch
      %48 = sbr.rel (0) target = $region17
    $region16: #{tpu_custom_call.1} parent=1 // pred_region
      %49 = dma.done [#allocation3], 256
    $region17: #{tpu_custom_call.1} parent=1 // pred_fallthru
      _
    // Predicated region
    $region18: #{tpu_custom_call.1} parent=1 // pred_check
      _
    $region19: #{tpu_custom_call.1} parent=1 // pred_check_branch
      %51 = sbr.rel (0) target = $region21
    $region20: #{tpu_custom_call.1} parent=1 // pred_region
      %52 = dma.done [#allocation6], 1280
    $region21: #{tpu_custom_call.1} parent=1 // pred_fallthru
      _
    // Predicated region
    $region22: #{tpu_custom_call.1} parent=1 // pred_check
      _
    $region23: #{tpu_custom_call.1} parent=1 // pred_check_branch
      %54 = sbr.rel (0) target = $region25
    $region24: #{tpu_custom_call.1} parent=1 // pred_region
      %55 = dma.done [#allocation6], 384
    $region25: #{tpu_custom_call.1} parent=1 // pred_fallthru
      _
    %v57 = vld [vmem:[#allocation2] sm:$0xff]
    %v58 = vld [vmem:[#allocation2 + $0x8] sm:$0xff]
    %v59 = vpack.c.bf16 %v58, %v57
    %v60 = vld [vmem:[#allocation5] sm:$0xf]
    %v61 = vld [vmem:[#allocation5 + $0x4] sm:$0xf]
    %v62 = vld [vmem:[#allocation5 + $0x8] sm:$0xf]
    %v63 = vld [vmem:[#allocation5 + $0xc] sm:$0xf]
    %v64 = vld [vmem:[#allocation5 + $0x10] sm:$0xf]
    %v65 = vld [vmem:[#allocation5 + $0x14] sm:$0xf]
    %v66 = vld [vmem:[#allocation5 + $0x18] sm:$0xf]
    %v67 = vld [vmem:[#allocation5 + $0x1c] sm:$0xf]
    %v68 = vld [vmem:[#allocation5 + $0x20] sm:$0xf]
    %v69 = vld [vmem:[#allocation5 + $0x24] sm:$0xf]
    %v70 = vld [vmem:[#allocation5 + $0x28] sm:$0xf]
    %v71 = vld [vmem:[#allocation5 + $0x2c] sm:$0xf]
    %v72 = vld [vmem:[#allocation5 + $0x30] sm:$0xf]
    %v73 = vld [vmem:[#allocation5 + $0x34] sm:$0xf]
    %v74 = vld [vmem:[#allocation5 + $0x38] sm:$0xf]
    %v75 = vld [vmem:[#allocation5 + $0x3c] sm:$0xf]
    %v76 = vld [vmem:[#allocation5 + $0x40] sm:$0xf]
    %v77 = vld [vmem:[#allocation5 + $0x44] sm:$0xf]
    %v78 = vld [vmem:[#allocation5 + $0x48] sm:$0xf]
    %v79 = vld [vmem:[#allocation5 + $0x4c] sm:$0xf]
    %v80 = vld [vmem:[#allocation7] sm:$0xff]
    %v81 = vld [vmem:[#allocation7 + $0x8] sm:$0xff]
    %v82 = vld [vmem:[#allocation7 + $0x10] sm:$0x1]
    %v83 = vld [vmem:[#allocation7 + $0x11] sm:$0x1]
    %v84 = vld [vmem:[#allocation7 + $0x12] sm:$0x1]
    %v85 = vld [vmem:[#allocation7 + $0x13] sm:$0x1]
    %v86 = vld [vmem:[#allocation7 + $0x14] sm:$0x1]
    %v87 = vld [vmem:[#allocation7 + $0x15] sm:$0x1]
    %v88 = vld [vmem:[#allocation7 + $0x16] sm:$0x1]
    %v89 = vld [vmem:[#allocation7 + $0x17] sm:$0x1]
    %v90 = vlaneseq
    %v91 = vshrl.u32 %v90, 7
    %v92 = vsub.s32 0, %v91
    %v93 = vrot.slane %v82, %v92
    %v98 = vunpack.c.l.b16 %v60
    %v99 = vunpack.c.l.b16 %v61
    %v100 = vunpack.c.l.b16 %v62
    %v101 = vunpack.c.l.b16 %v63
    %v102 = vpack.c.b16 %v99, %v98
    %v103 = vpack.c.b16 %v101, %v100
    %vm106 = vcmask 261120
    %v108 = vsel %vm106, %v59, 0
    %110 = vmatprep.subr.bf16.mxu0 0
    %111 = vmatpush1.bf16.msra.mxu0 %v102
    %112 = vmatprep.subr.bf16.mxu0 0
    %113 = vmatpush1.bf16.msra.mxu0 %v103
    %114 = vmatprep.subr.bf16.mxu0 0
    %115 = vmatpush1.bf16.msra.mxu0 0
    %116 = vmatprep.subr.bf16.mxu0 0
    %117 = vmatpush1.bf16.msra.mxu0 0
    %118 = vmatprep.subr.bf16.mxu0 0
    %119 = vmatpush1.bf16.msra.mxu0 0
    %120 = vmatprep.subr.bf16.mxu0 0
    %121 = vmatpush1.bf16.msra.mxu0 0
    %122 = vmatprep.subr.bf16.mxu0 0
    %123 = vmatpush1.bf16.msra.mxu0 0
    %124 = vmatprep.subr.bf16.mxu0 0
    %125 = vmatpush1.bf16.msra.mxu0 0
    %126 = vmatprep.subr.bf16.mxu0 0
    %127 = vmatpush1.bf16.msra.mxu0 0
    %128 = vmatprep.subr.bf16.mxu0 0
    %129 = vmatpush1.bf16.msra.mxu0 0
    %130 = vmatprep.subr.bf16.mxu0 0
    %131 = vmatpush1.bf16.msra.mxu0 0
    %132 = vmatprep.subr.bf16.mxu0 0
    %133 = vmatpush1.bf16.msra.mxu0 0
    %134 = vmatprep.subr.bf16.mxu0 0
    %135 = vmatpush1.bf16.msra.mxu0 0
    %136 = vmatprep.subr.bf16.mxu0 0
    %137 = vmatpush1.bf16.msra.mxu0 0
    %138 = vmatprep.subr.bf16.mxu0 0
    %139 = vmatpush1.bf16.msra.mxu0 0
    %140 = vmatprep.subr.bf16.mxu0 0
    %141 = vmatpush1.bf16.msra.mxu0 0
    %142 = vmatprep.mubr.bf16.mxu0 0
    %143 = vmatmul.mubr.bf16.gmra.mrb[0].mxu0 %v108
    %v144 = vpop.f32.mrb[0].mxu0
    %v145 = vadd.f32 %v93, %v144
    %v146 = vpop.f32.mrb[0].mxu0
    %v147 = vpop.f32.mrb[0].mxu0
    %v148 = vadd.f32 %v93, %v147
    %v149 = vpop.f32.mrb[0].mxu0
    %150 = vdwg.mxu0
    %v151 = vpack.c.bf16 %v148, %v145
    %153 = vrot.lane.b32.xlu0 %v151, 120
    %v154 = vpop.permute.xlu0 %153
    %155 = vrot.lane.b32.xlu0 %v151, 112
    %v156 = vpop.permute.xlu0 %155
    %157 = vrot.lane.b32.xlu0 %v151, 104
    %v158 = vpop.permute.xlu0 %157
    %159 = vrot.lane.b32.xlu0 %v151, 96
    %v160 = vpop.permute.xlu0 %159
    %vm161 = vcmask 64512
    %v163 = vsel %vm161, %v151, 0
    %v166 = vsel %vm161, %v160, 0
    %168 = vmatprep.subr.bf16.mxu0 0
    %169 = vmatpush1.bf16.xpose.msra.mxu0 %v166
    %170 = vmatprep.subr.bf16.mxu0 0
    %171 = vmatpush1.bf16.xpose.msra.mxu0 0
    %172 = vmatprep.subr.bf16.mxu0 0
    %173 = vmatpush1.bf16.xpose.msra.mxu0 0
    %174 = vmatprep.subr.bf16.mxu0 0
    %175 = vmatpush1.bf16.xpose.msra.mxu0 0
    %176 = vmatprep.subr.bf16.mxu0 0
    %177 = vmatpush1.bf16.xpose.msra.mxu0 0
    %178 = vmatprep.subr.bf16.mxu0 0
    %179 = vmatpush1.bf16.xpose.msra.mxu0 0
    %180 = vmatprep.subr.bf16.mxu0 0
    %181 = vmatpush1.bf16.xpose.msra.mxu0 0
    %182 = vmatprep.subr.bf16.mxu0 0
    %183 = vmatpush1.bf16.xpose.msra.mxu0 0
    %184 = vmatprep.subr.bf16.mxu0 0
    %185 = vmatpush1.bf16.xpose.msra.mxu0 0
    %186 = vmatprep.subr.bf16.mxu0 0
    %187 = vmatpush1.bf16.xpose.msra.mxu0 0
    %188 = vmatprep.subr.bf16.mxu0 0
    %189 = vmatpush1.bf16.xpose.msra.mxu0 0
    %190 = vmatprep.subr.bf16.mxu0 0
    %191 = vmatpush1.bf16.xpose.msra.mxu0 0
    %192 = vmatprep.subr.bf16.mxu0 0
    %193 = vmatpush1.bf16.xpose.msra.mxu0 0
    %194 = vmatprep.subr.bf16.mxu0 0
    %195 = vmatpush1.bf16.xpose.msra.mxu0 0
    %196 = vmatprep.subr.bf16.mxu0 0
    %197 = vmatpush1.bf16.xpose.msra.mxu0 0
    %198 = vmatprep.subr.bf16.mxu0 0
    %199 = vmatpush1.bf16.xpose.msra.mxu0 0
    %200 = vmatprep.mubr.bf16.mxu0 0
    %201 = vmatmul.mubr.bf16.gmra.mrb[0].mxu0 %v163
    %v202 = vpop.f32.mrb[0].mxu0
    %v203 = vadd.f32 %v80, %v202
    %v204 = vpop.f32.mrb[0].mxu0
    %v205 = vpop.f32.mrb[0].mxu0
    %v206 = vadd.f32 %v81, %v205
    %v207 = vpop.f32.mrb[0].mxu0
    %208 = vdwg.mxu0
    %209 = vrot.lane.b32.xlu0 %v154, 96
    %v210 = vpop.permute.xlu0 %209
    %v212 = vsel %vm161, %v154, 0
    %v215 = vsel %vm161, %v210, 0
    %217 = vmatprep.subr.bf16.mxu0 0
    %218 = vmatpush1.bf16.xpose.msra.mxu0 %v215
    %219 = vmatprep.subr.bf16.mxu0 0
    %220 = vmatpush1.bf16.xpose.msra.mxu0 0
    %221 = vmatprep.subr.bf16.mxu0 0
    %222 = vmatpush1.bf16.xpose.msra.mxu0 0
    %223 = vmatprep.subr.bf16.mxu0 0
    %224 = vmatpush1.bf16.xpose.msra.mxu0 0
    %225 = vmatprep.subr.bf16.mxu0 0
    %226 = vmatpush1.bf16.xpose.msra.mxu0 0
    %227 = vmatprep.subr.bf16.mxu0 0
    %228 = vmatpush1.bf16.xpose.msra.mxu0 0
    %229 = vmatprep.subr.bf16.mxu0 0
    %230 = vmatpush1.bf16.xpose.msra.mxu0 0
    %231 = vmatprep.subr.bf16.mxu0 0
    %232 = vmatpush1.bf16.xpose.msra.mxu0 0
    %233 = vmatprep.subr.bf16.mxu0 0
    %234 = vmatpush1.bf16.xpose.msra.mxu0 0
    %235 = vmatprep.subr.bf16.mxu0 0
    %236 = vmatpush1.bf16.xpose.msra.mxu0 0
    %237 = vmatprep.subr.bf16.mxu0 0
    %238 = vmatpush1.bf16.xpose.msra.mxu0 0
    %239 = vmatprep.subr.bf16.mxu0 0
    %240 = vmatpush1.bf16.xpose.msra.mxu0 0
    %241 = vmatprep.subr.bf16.mxu0 0
    %242 = vmatpush1.bf16.xpose.msra.mxu0 0
    %243 = vmatprep.subr.bf16.mxu0 0
    %244 = vmatpush1.bf16.xpose.msra.mxu0 0
    %245 = vmatprep.subr.bf16.mxu0 0
    %246 = vmatpush1.bf16.xpose.msra.mxu0 0
    %247 = vmatprep.subr.bf16.mxu0 0
    %248 = vmatpush1.bf16.xpose.msra.mxu0 0
    %249 = vmatprep.mubr.bf16.mxu0 0
    %250 = vmatmul.mubr.bf16.gmra.mrb[0].mxu0 %v212
    %v251 = vpop.f32.mrb[0].mxu0
    %v252 = vadd.f32 %v80, %v251
    %v253 = vpop.f32.mrb[0].mxu0
    %v254 = vpop.f32.mrb[0].mxu0
    %v255 = vadd.f32 %v81, %v254
    %v256 = vpop.f32.mrb[0].mxu0
    %257 = vdwg.mxu0
    %258 = vrot.lane.b32.xlu0 %v156, 96
    %v259 = vpop.permute.xlu0 %258
    %v261 = vsel %vm161, %v156, 0
    %v264 = vsel %vm161, %v259, 0
    %266 = vmatprep.subr.bf16.mxu0 0
    %267 = vmatpush1.bf16.xpose.msra.mxu0 %v264
    %268 = vmatprep.subr.bf16.mxu0 0
    %269 = vmatpush1.bf16.xpose.msra.mxu0 0
    %270 = vmatprep.subr.bf16.mxu0 0
    %271 = vmatpush1.bf16.xpose.msra.mxu0 0
    %272 = vmatprep.subr.bf16.mxu0 0
    %273 = vmatpush1.bf16.xpose.msra.mxu0 0
    %274 = vmatprep.subr.bf16.mxu0 0
    %275 = vmatpush1.bf16.xpose.msra.mxu0 0
    %276 = vmatprep.subr.bf16.mxu0 0
    %277 = vmatpush1.bf16.xpose.msra.mxu0 0
    %278 = vmatprep.subr.bf16.mxu0 0
    %279 = vmatpush1.bf16.xpose.msra.mxu0 0
    %280 = vmatprep.subr.bf16.mxu0 0
    %281 = vmatpush1.bf16.xpose.msra.mxu0 0
    %282 = vmatprep.subr.bf16.mxu0 0
    %283 = vmatpush1.bf16.xpose.msra.mxu0 0
    %284 = vmatprep.subr.bf16.mxu0 0
    %285 = vmatpush1.bf16.xpose.msra.mxu0 0
    %286 = vmatprep.subr.bf16.mxu0 0
    %287 = vmatpush1.bf16.xpose.msra.mxu0 0
    %288 = vmatprep.subr.bf16.mxu0 0
    %289 = vmatpush1.bf16.xpose.msra.mxu0 0
    %290 = vmatprep.subr.bf16.mxu0 0
    %291 = vmatpush1.bf16.xpose.msra.mxu0 0
    %292 = vmatprep.subr.bf16.mxu0 0
    %293 = vmatpush1.bf16.xpose.msra.mxu0 0
    %294 = vmatprep.subr.bf16.mxu0 0
    %295 = vmatpush1.bf16.xpose.msra.mxu0 0
    %296 = vmatprep.subr.bf16.mxu0 0
    %297 = vmatpush1.bf16.xpose.msra.mxu0 0
    %298 = vmatprep.mubr.bf16.mxu0 0
    %299 = vmatmul.mubr.bf16.gmra.mrb[0].mxu0 %v261
    %v300 = vpop.f32.mrb[0].mxu0
    %v301 = vadd.f32 %v80, %v300
    %v302 = vpop.f32.mrb[0].mxu0
    %v303 = vpop.f32.mrb[0].mxu0
    %v304 = vadd.f32 %v81, %v303
    %v305 = vpop.f32.mrb[0].mxu0
    %306 = vdwg.mxu0
    %307 = vrot.lane.b32.xlu0 %v158, 96
    %v308 = vpop.permute.xlu0 %307
    %v310 = vsel %vm161, %v158, 0
    %v313 = vsel %vm161, %v308, 0
    %315 = vmatprep.subr.bf16.mxu0 0
    %316 = vmatpush1.bf16.xpose.msra.mxu0 %v313
    %317 = vmatprep.subr.bf16.mxu0 0
    %318 = vmatpush1.bf16.xpose.msra.mxu0 0
    %319 = vmatprep.subr.bf16.mxu0 0
    %320 = vmatpush1.bf16.xpose.msra.mxu0 0
    %321 = vmatprep.subr.bf16.mxu0 0
    %322 = vmatpush1.bf16.xpose.msra.mxu0 0
    %323 = vmatprep.subr.bf16.mxu0 0
    %324 = vmatpush1.bf16.xpose.msra.mxu0 0
    %325 = vmatprep.subr.bf16.mxu0 0
    %326 = vmatpush1.bf16.xpose.msra.mxu0 0
    %327 = vmatprep.subr.bf16.mxu0 0
    %328 = vmatpush1.bf16.xpose.msra.mxu0 0
    %329 = vmatprep.subr.bf16.mxu0 0
    %330 = vmatpush1.bf16.xpose.msra.mxu0 0
    %331 = vmatprep.subr.bf16.mxu0 0
    %332 = vmatpush1.bf16.xpose.msra.mxu0 0
    %333 = vmatprep.subr.bf16.mxu0 0
    %334 = vmatpush1.bf16.xpose.msra.mxu0 0
    %335 = vmatprep.subr.bf16.mxu0 0
    %336 = vmatpush1.bf16.xpose.msra.mxu0 0
    %337 = vmatprep.subr.bf16.mxu0 0
    %338 = vmatpush1.bf16.xpose.msra.mxu0 0
    %339 = vmatprep.subr.bf16.mxu0 0
    %340 = vmatpush1.bf16.xpose.msra.mxu0 0
    %341 = vmatprep.subr.bf16.mxu0 0
    %342 = vmatpush1.bf16.xpose.msra.mxu0 0
    %343 = vmatprep.subr.bf16.mxu0 0
    %344 = vmatpush1.bf16.xpose.msra.mxu0 0
    %345 = vmatprep.subr.bf16.mxu0 0
    %346 = vmatpush1.bf16.xpose.msra.mxu0 0
    %347 = vmatprep.mubr.bf16.mxu0 0
    %348 = vmatmul.mubr.bf16.gmra.mrb[0].mxu0 %v310
    %v349 = vpop.f32.mrb[0].mxu0
    %v350 = vadd.f32 %v80, %v349
    %v351 = vpop.f32.mrb[0].mxu0
    %v352 = vpop.f32.mrb[0].mxu0
    %v353 = vadd.f32 %v81, %v352
    %v354 = vpop.f32.mrb[0].mxu0
    %355 = vdwg.mxu0
    %vm356 = vcmask 130048
    %v357 = vsel %vm356, %v203, -inf
    %358 = vmax.xlane.f32.xlu0 %v357
    %v359 = vpop.xlane.xlu0 %358
    %v360 = vsel %vm356, %v206, -inf
    %361 = vmax.xlane.f32.xlu0 %v360
    %v362 = vpop.xlane.xlu0 %361
    %v363 = vsel %vm356, %v252, -inf
    %364 = vmax.xlane.f32.xlu0 %v363
    %v365 = vpop.xlane.xlu0 %364
    %v366 = vsel %vm356, %v255, -inf
    %367 = vmax.xlane.f32.xlu0 %v366
    %v368 = vpop.xlane.xlu0 %367
    %v369 = vsel %vm356, %v301, -inf
    %370 = vmax.xlane.f32.xlu0 %v369
    %v371 = vpop.xlane.xlu0 %370
    %v372 = vsel %vm356, %v304, -inf
    %373 = vmax.xlane.f32.xlu0 %v372
    %v374 = vpop.xlane.xlu0 %373
    %v375 = vsel %vm356, %v350, -inf
    %376 = vmax.xlane.f32.xlu0 %v375
    %v377 = vpop.xlane.xlu0 %376
    %v378 = vsel %vm356, %v353, -inf
    %379 = vmax.xlane.f32.xlu0 %v378
    %v380 = vpop.xlane.xlu0 %379
    %v381 = vsub.f32 %v203, %v359
    %v382 = vsub.f32 %v206, %v362
    %v383 = vsub.f32 %v252, %v365
    %v384 = vsub.f32 %v255, %v368
    %v385 = vsub.f32 %v301, %v371
    %v386 = vsub.f32 %v304, %v374
    %v387 = vsub.f32 %v350, %v377
    %v388 = vsub.f32 %v353, %v380
    %v389 = vmul.f32 %v381, 1.442695
    %v390 = vpow.pop %v389
    %v391 = vmul.f32 %v382, 1.442695
    %v392 = vpow.pop %v391
    %v393 = vmul.f32 %v383, 1.442695
    %v394 = vpow.pop %v393
    %v395 = vmul.f32 %v384, 1.442695
    %v396 = vpow.pop %v395
    %v397 = vmul.f32 %v385, 1.442695
    %v398 = vpow.pop %v397
    %v399 = vmul.f32 %v386, 1.442695
    %v400 = vpow.pop %v399
    %v401 = vmul.f32 %v387, 1.442695
    %v402 = vpow.pop %v401
    %v403 = vmul.f32 %v388, 1.442695
    %v404 = vpow.pop %v403
    %v405 = vsel %vm356, %v390, 0.0
    %406 = vadd.xlane.f32.xlu0 %v405
    %v407 = vpop.xlane.xlu0 %406
    %v408 = vsel %vm356, %v392, 0.0
    %409 = vadd.xlane.f32.xlu0 %v408
    %v410 = vpop.xlane.xlu0 %409
    %v411 = vsel %vm356, %v394, 0.0
    %412 = vadd.xlane.f32.xlu0 %v411
    %v413 = vpop.xlane.xlu0 %412
    %v414 = vsel %vm356, %v396, 0.0
    %415 = vadd.xlane.f32.xlu0 %v414
    %v416 = vpop.xlane.xlu0 %415
    %v417 = vsel %vm356, %v398, 0.0
    %418 = vadd.xlane.f32.xlu0 %v417
    %v419 = vpop.xlane.xlu0 %418
    %v420 = vsel %vm356, %v400, 0.0
    %421 = vadd.xlane.f32.xlu0 %v420
    %v422 = vpop.xlane.xlu0 %421
    %v423 = vsel %vm356, %v402, 0.0
    %424 = vadd.xlane.f32.xlu0 %v423
    %v425 = vpop.xlane.xlu0 %424
    %v426 = vsel %vm356, %v404, 0.0
    %427 = vadd.xlane.f32.xlu0 %v426
    %v428 = vpop.xlane.xlu0 %427
    %v429 = vrcp.pop %v407
    %v430 = vrcp.pop %v410
    %v431 = vrcp.pop %v413
    %v432 = vrcp.pop %v416
    %v433 = vrcp.pop %v419
    %v434 = vrcp.pop %v422
    %v435 = vrcp.pop %v425
    %v436 = vrcp.pop %v428
    %v437 = vmul.f32 %v390, %v429
    %v438 = vmul.f32 %v392, %v430
    %v439 = vmul.f32 %v394, %v431
    %v440 = vmul.f32 %v396, %v432
    %v441 = vmul.f32 %v398, %v433
    %v442 = vmul.f32 %v400, %v434
    %v443 = vmul.f32 %v402, %v435
    %v444 = vmul.f32 %v404, %v436
    %v445 = vpack.c.bf16 %v438, %v437
    %v446 = vpack.c.bf16 %v440, %v439
    %v447 = vpack.c.bf16 %v442, %v441
    %v448 = vpack.c.bf16 %v444, %v443
    %449 = vrot.lane.b32.xlu0 %v151, 64
    %v450 = vpop.permute.xlu0 %449
    %v453 = vsel %vm356, %v445, 0
    %455 = vmatprep.subr.bf16.mxu0 0
    %456 = vmatpush1.bf16.msra.mxu0 %v450
    %457 = vmatprep.subr.bf16.mxu0 0
    %458 = vmatpush1.bf16.msra.mxu0 0
    %459 = vmatprep.subr.bf16.mxu0 0
    %460 = vmatpush1.bf16.msra.mxu0 0
    %461 = vmatprep.subr.bf16.mxu0 0
    %462 = vmatpush1.bf16.msra.mxu0 0
    %463 = vmatprep.subr.bf16.mxu0 0
    %464 = vmatpush1.bf16.msra.mxu0 0
    %465 = vmatprep.subr.bf16.mxu0 0
    %466 = vmatpush1.bf16.msra.mxu0 0
    %467 = vmatprep.subr.bf16.mxu0 0
    %468 = vmatpush1.bf16.msra.mxu0 0
    %469 = vmatprep.subr.bf16.mxu0 0
    %470 = vmatpush1.bf16.msra.mxu0 0
    %471 = vmatprep.subr.bf16.mxu0 0
    %472 = vmatpush1.bf16.msra.mxu0 0
    %473 = vmatprep.subr.bf16.mxu0 0
    %474 = vmatpush1.bf16.msra.mxu0 0
    %475 = vmatprep.subr.bf16.mxu0 0
    %476 = vmatpush1.bf16.msra.mxu0 0
    %477 = vmatprep.subr.bf16.mxu0 0
    %478 = vmatpush1.bf16.msra.mxu0 0
    %479 = vmatprep.subr.bf16.mxu0 0
    %480 = vmatpush1.bf16.msra.mxu0 0
    %481 = vmatprep.subr.bf16.mxu0 0
    %482 = vmatpush1.bf16.msra.mxu0 0
    %483 = vmatprep.subr.bf16.mxu0 0
    %484 = vmatpush1.bf16.msra.mxu0 0
    %485 = vmatprep.subr.bf16.mxu0 0
    %486 = vmatpush1.bf16.msra.mxu0 0
    %487 = vmatprep.mubr.bf16.mxu0 0
    %488 = vmatmul.mubr.bf16.gmra.mrb[0].mxu0 %v453
    %v489 = vpop.f32.mrb[0].mxu0
    %v490 = vadd.f32 0.0, %v489
    %v491 = vpop.f32.mrb[0].mxu0
    %v492 = vpop.f32.mrb[0].mxu0
    %v493 = vadd.f32 0.0, %v492
    %v494 = vpop.f32.mrb[0].mxu0
    %495 = vdwg.mxu0
    %496 = vrot.lane.b32.xlu0 %v154, 64
    %v497 = vpop.permute.xlu0 %496
    %v500 = vsel %vm356, %v446, 0
    %502 = vmatprep.subr.bf16.mxu0 0
    %503 = vmatpush1.bf16.msra.mxu0 %v497
    %504 = vmatprep.subr.bf16.mxu0 0
    %505 = vmatpush1.bf16.msra.mxu0 0
    %506 = vmatprep.subr.bf16.mxu0 0
    %507 = vmatpush1.bf16.msra.mxu0 0
    %508 = vmatprep.subr.bf16.mxu0 0
    %509 = vmatpush1.bf16.msra.mxu0 0
    %510 = vmatprep.subr.bf16.mxu0 0
    %511 = vmatpush1.bf16.msra.mxu0 0
    %512 = vmatprep.subr.bf16.mxu0 0
    %513 = vmatpush1.bf16.msra.mxu0 0
    %514 = vmatprep.subr.bf16.mxu0 0
    %515 = vmatpush1.bf16.msra.mxu0 0
    %516 = vmatprep.subr.bf16.mxu0 0
    %517 = vmatpush1.bf16.msra.mxu0 0
    %518 = vmatprep.subr.bf16.mxu0 0
    %519 = vmatpush1.bf16.msra.mxu0 0
    %520 = vmatprep.subr.bf16.mxu0 0
    %521 = vmatpush1.bf16.msra.mxu0 0
    %522 = vmatprep.subr.bf16.mxu0 0
    %523 = vmatpush1.bf16.msra.mxu0 0
    %524 = vmatprep.subr.bf16.mxu0 0
    %525 = vmatpush1.bf16.msra.mxu0 0
    %526 = vmatprep.subr.bf16.mxu0 0
    %527 = vmatpush1.bf16.msra.mxu0 0
    %528 = vmatprep.subr.bf16.mxu0 0
    %529 = vmatpush1.bf16.msra.mxu0 0
    %530 = vmatprep.subr.bf16.mxu0 0
    %531 = vmatpush1.bf16.msra.mxu0 0
    %532 = vmatprep.subr.bf16.mxu0 0
    %533 = vmatpush1.bf16.msra.mxu0 0
    %534 = vmatprep.mubr.bf16.mxu0 0
    %535 = vmatmul.mubr.bf16.gmra.mrb[0].mxu0 %v500
    %v536 = vpop.f32.mrb[0].mxu0
    %v537 = vadd.f32 0.0, %v536
    %v538 = vpop.f32.mrb[0].mxu0
    %v539 = vpop.f32.mrb[0].mxu0
    %v540 = vadd.f32 0.0, %v539
    %v541 = vpop.f32.mrb[0].mxu0
    %542 = vdwg.mxu0
    %543 = vrot.lane.b32.xlu0 %v156, 64
    %v544 = vpop.permute.xlu0 %543
    %v547 = vsel %vm356, %v447, 0
    %549 = vmatprep.subr.bf16.mxu0 0
    %550 = vmatpush1.bf16.msra.mxu0 %v544
    %551 = vmatprep.subr.bf16.mxu0 0
    %552 = vmatpush1.bf16.msra.mxu0 0
    %553 = vmatprep.subr.bf16.mxu0 0
    %554 = vmatpush1.bf16.msra.mxu0 0
    %555 = vmatprep.subr.bf16.mxu0 0
    %556 = vmatpush1.bf16.msra.mxu0 0
    %557 = vmatprep.subr.bf16.mxu0 0
    %558 = vmatpush1.bf16.msra.mxu0 0
    %559 = vmatprep.subr.bf16.mxu0 0
    %560 = vmatpush1.bf16.msra.mxu0 0
    %561 = vmatprep.subr.bf16.mxu0 0
    %562 = vmatpush1.bf16.msra.mxu0 0
    %563 = vmatprep.subr.bf16.mxu0 0
    %564 = vmatpush1.bf16.msra.mxu0 0
    %565 = vmatprep.subr.bf16.mxu0 0
    %566 = vmatpush1.bf16.msra.mxu0 0
    %567 = vmatprep.subr.bf16.mxu0 0
    %568 = vmatpush1.bf16.msra.mxu0 0
    %569 = vmatprep.subr.bf16.mxu0 0
    %570 = vmatpush1.bf16.msra.mxu0 0
    %571 = vmatprep.subr.bf16.mxu0 0
    %572 = vmatpush1.bf16.msra.mxu0 0
    %573 = vmatprep.subr.bf16.mxu0 0
    %574 = vmatpush1.bf16.msra.mxu0 0
    %575 = vmatprep.subr.bf16.mxu0 0
    %576 = vmatpush1.bf16.msra.mxu0 0
    %577 = vmatprep.subr.bf16.mxu0 0
    %578 = vmatpush1.bf16.msra.mxu0 0
    %579 = vmatprep.subr.bf16.mxu0 0
    %580 = vmatpush1.bf16.msra.mxu0 0
    %581 = vmatprep.mubr.bf16.mxu0 0
    %582 = vmatmul.mubr.bf16.gmra.mrb[0].mxu0 %v547
    %v583 = vpop.f32.mrb[0].mxu0
    %v584 = vadd.f32 0.0, %v583
    %v585 = vpop.f32.mrb[0].mxu0
    %v586 = vpop.f32.mrb[0].mxu0
    %v587 = vadd.f32 0.0, %v586
    %v588 = vpop.f32.mrb[0].mxu0
    %589 = vdwg.mxu0
    %590 = vrot.lane.b32.xlu0 %v158, 64
    %v591 = vpop.permute.xlu0 %590
    %v594 = vsel %vm356, %v448, 0
    %596 = vmatprep.subr.bf16.mxu0 0
    %597 = vmatpush1.bf16.msra.mxu0 %v591
    %598 = vmatprep.subr.bf16.mxu0 0
    %599 = vmatpush1.bf16.msra.mxu0 0
    %600 = vmatprep.subr.bf16.mxu0 0
    %601 = vmatpush1.bf16.msra.mxu0 0
    %602 = vmatprep.subr.bf16.mxu0 0
    %603 = vmatpush1.bf16.msra.mxu0 0
    %604 = vmatprep.subr.bf16.mxu0 0
    %605 = vmatpush1.bf16.msra.mxu0 0
    %606 = vmatprep.subr.bf16.mxu0 0
    %607 = vmatpush1.bf16.msra.mxu0 0
    %608 = vmatprep.subr.bf16.mxu0 0
    %609 = vmatpush1.bf16.msra.mxu0 0
    %610 = vmatprep.subr.bf16.mxu0 0
    %611 = vmatpush1.bf16.msra.mxu0 0
    %612 = vmatprep.subr.bf16.mxu0 0
    %613 = vmatpush1.bf16.msra.mxu0 0
    %614 = vmatprep.subr.bf16.mxu0 0
    %615 = vmatpush1.bf16.msra.mxu0 0
    %616 = vmatprep.subr.bf16.mxu0 0
    %617 = vmatpush1.bf16.msra.mxu0 0
    %618 = vmatprep.subr.bf16.mxu0 0
    %619 = vmatpush1.bf16.msra.mxu0 0
    %620 = vmatprep.subr.bf16.mxu0 0
    %621 = vmatpush1.bf16.msra.mxu0 0
    %622 = vmatprep.subr.bf16.mxu0 0
    %623 = vmatpush1.bf16.msra.mxu0 0
    %624 = vmatprep.subr.bf16.mxu0 0
    %625 = vmatpush1.bf16.msra.mxu0 0
    %626 = vmatprep.subr.bf16.mxu0 0
    %627 = vmatpush1.bf16.msra.mxu0 0
    %628 = vmatprep.mubr.bf16.mxu0 0
    %629 = vmatmul.mubr.bf16.gmra.mrb[0].mxu0 %v594
    %v630 = vpop.f32.mrb[0].mxu0
    %v631 = vadd.f32 0.0, %v630
    %v632 = vpop.f32.mrb[0].mxu0
    %v633 = vpop.f32.mrb[0].mxu0
    %v634 = vadd.f32 0.0, %v633
    %v635 = vpop.f32.mrb[0].mxu0
    %636 = vdwg.mxu0
    %639 = vrot.lane.b32.xlu0 %v537, 8
    %v640 = vpop.permute.xlu0 %639
    %641 = vrot.lane.b32.xlu0 %v540, 8
    %v642 = vpop.permute.xlu0 %641
    %647 = vrot.lane.b32.xlu0 %v584, 16
    %v648 = vpop.permute.xlu0 %647
    %649 = vrot.lane.b32.xlu0 %v587, 16
    %v650 = vpop.permute.xlu0 %649
    %655 = vrot.lane.b32.xlu0 %v631, 24
    %v656 = vpop.permute.xlu0 %655
    %657 = vrot.lane.b32.xlu0 %v634, 24
    %v658 = vpop.permute.xlu0 %657
    %v661 = vsel %vm161, %v490, %v640
    %v662 = vsel %vm161, %v493, %v642
    %v663 = vsel %vm356, %v661, %v648
    %v664 = vsel %vm356, %v662, %v650
    %vm665 = vcmask 195584
    %v666 = vsel %vm665, %v663, %v656
    %v667 = vsel %vm665, %v664, %v658
    %v668 = vpack.c.bf16 %v667, %v666
    %v669 = vlaneseq
    %v670 = vshrl.u32 %v669, 7
    %v671 = vsub.s32 0, %v670
    %v672 = vrot.slane %v84, %v671
    %v677 = vunpack.c.l.b16 %v64
    %v678 = vunpack.c.l.b16 %v65
    %v679 = vunpack.c.l.b16 %v66
    %v680 = vunpack.c.l.b16 %v67
    %v681 = vpack.c.b16 %v678, %v677
    %v682 = vpack.c.b16 %v680, %v679
    %v686 = vsel %vm106, %v668, 0
    %688 = vmatprep.subr.bf16.mxu0 0
    %689 = vmatpush1.bf16.msra.mxu0 %v681
    %690 = vmatprep.subr.bf16.mxu0 0
    %691 = vmatpush1.bf16.msra.mxu0 %v682
    %692 = vmatprep.subr.bf16.mxu0 0
    %693 = vmatpush1.bf16.msra.mxu0 0
    %694 = vmatprep.subr.bf16.mxu0 0
    %695 = vmatpush1.bf16.msra.mxu0 0
    %696 = vmatprep.subr.bf16.mxu0 0
    %697 = vmatpush1.bf16.msra.mxu0 0
    %698 = vmatprep.subr.bf16.mxu0 0
    %699 = vmatpush1.bf16.msra.mxu0 0
    %700 = vmatprep.subr.bf16.mxu0 0
    %701 = vmatpush1.bf16.msra.mxu0 0
    %702 = vmatprep.subr.bf16.mxu0 0
    %703 = vmatpush1.bf16.msra.mxu0 0
    %704 = vmatprep.subr.bf16.mxu0 0
    %705 = vmatpush1.bf16.msra.mxu0 0
    %706 = vmatprep.subr.bf16.mxu0 0
    %707 = vmatpush1.bf16.msra.mxu0 0
    %708 = vmatprep.subr.bf16.mxu0 0
    %709 = vmatpush1.bf16.msra.mxu0 0
    %710 = vmatprep.subr.bf16.mxu0 0
    %711 = vmatpush1.bf16.msra.mxu0 0
    %712 = vmatprep.subr.bf16.mxu0 0
    %713 = vmatpush1.bf16.msra.mxu0 0
    %714 = vmatprep.subr.bf16.mxu0 0
    %715 = vmatpush1.bf16.msra.mxu0 0
    %716 = vmatprep.subr.bf16.mxu0 0
    %717 = vmatpush1.bf16.msra.mxu0 0
    %718 = vmatprep.subr.bf16.mxu0 0
    %719 = vmatpush1.bf16.msra.mxu0 0
    %720 = vmatprep.mubr.bf16.mxu0 0
    %721 = vmatmul.mubr.bf16.gmra.mrb[0].mxu0 %v686
    %v722 = vpop.f32.mrb[0].mxu0
    %v723 = vadd.f32 %v672, %v722
    %v724 = vpop.f32.mrb[0].mxu0
    %v725 = vpop.f32.mrb[0].mxu0
    %v726 = vadd.f32 %v672, %v725
    %v727 = vpop.f32.mrb[0].mxu0
    %728 = vdwg.mxu0
    %v729 = vadd.f32 %v57, %v723
    %v730 = vadd.f32 %v58, %v726
    %v731 = vsel %vm106, %v729, 0.0
    %732 = vadd.xlane.f32.xlu0 %v731
    %v733 = vpop.xlane.xlu0 %732
    %v734 = vsel %vm106, %v730, 0.0
    %735 = vadd.xlane.f32.xlu0 %v734
    %v736 = vpop.xlane.xlu0 %735
    %v737 = vrcp.pop 32.0
    %v738 = vmul.f32 %v733, %v737
    %v739 = vmul.f32 %v736, %v737
    %v740 = vsub.f32 %v729, %v738
    %v741 = vsub.f32 %v730, %v739
    %v742 = vmul.f32 %v740, %v740
    %v743 = vmul.f32 %v741, %v741
    %v744 = vsel %vm106, %v742, 0.0
    %745 = vadd.xlane.f32.xlu0 %v744
    %v746 = vpop.xlane.xlu0 %745
    %v747 = vsel %vm106, %v743, 0.0
    %748 = vadd.xlane.f32.xlu0 %v747
    %v749 = vpop.xlane.xlu0 %748
    %v750 = vmul.f32 %v746, %v737
    %v751 = vmul.f32 %v749, %v737
    %v752 = vadd.f32 %v750, 1e-05
    %v753 = vadd.f32 %v751, 1e-05
    %v754 = vrsqrt.pop %v752
    %v755 = vrsqrt.pop %v753
    %v756 = vmul.f32 %v740, %v754
    %v757 = vmul.f32 %v741, %v755
    %v758 = vlaneseq
    %v759 = vshrl.u32 %v758, 7
    %v760 = vsub.s32 0, %v759
    %v761 = vrot.slane %v85, %v760
    %v762 = vmul.f32 %v756, %v761
    %v763 = vmul.f32 %v757, %v761
    %v764 = vlaneseq
    %v765 = vshrl.u32 %v764, 7
    %v766 = vsub.s32 0, %v765
    %v767 = vrot.slane %v86, %v766
    %v768 = vadd.f32 %v762, %v767
    %v769 = vadd.f32 %v763, %v767
    %v770 = vpack.c.bf16 %v769, %v768
    %v771 = vlaneseq
    %v772 = vshrl.u32 %v771, 7
    %v773 = vsub.s32 0, %v772
    %v774 = vrot.slane %v83, %v773
    %v779 = vunpack.c.l.b16 %v68
    %v780 = vunpack.c.l.b16 %v69
    %v781 = vunpack.c.l.b16 %v70
    %v782 = vunpack.c.l.b16 %v71
    %v783 = vpack.c.b16 %v780, %v779
    %v784 = vpack.c.b16 %v782, %v781
    %v788 = vsel %vm106, %v770, 0
    %790 = vmatprep.subr.bf16.mxu0 0
    %791 = vmatpush1.bf16.msra.mxu0 %v783
    %792 = vmatprep.subr.bf16.mxu0 0
    %793 = vmatpush1.bf16.msra.mxu0 %v784
    %794 = vmatprep.subr.bf16.mxu0 0
    %795 = vmatpush1.bf16.msra.mxu0 0
    %796 = vmatprep.subr.bf16.mxu0 0
    %797 = vmatpush1.bf16.msra.mxu0 0
    %798 = vmatprep.subr.bf16.mxu0 0
    %799 = vmatpush1.bf16.msra.mxu0 0
    %800 = vmatprep.subr.bf16.mxu0 0
    %801 = vmatpush1.bf16.msra.mxu0 0
    %802 = vmatprep.subr.bf16.mxu0 0
    %803 = vmatpush1.bf16.msra.mxu0 0
    %804 = vmatprep.subr.bf16.mxu0 0
    %805 = vmatpush1.bf16.msra.mxu0 0
    %806 = vmatprep.subr.bf16.mxu0 0
    %807 = vmatpush1.bf16.msra.mxu0 0
    %808 = vmatprep.subr.bf16.mxu0 0
    %809 = vmatpush1.bf16.msra.mxu0 0
    %810 = vmatprep.subr.bf16.mxu0 0
    %811 = vmatpush1.bf16.msra.mxu0 0
    %812 = vmatprep.subr.bf16.mxu0 0
    %813 = vmatpush1.bf16.msra.mxu0 0
    %814 = vmatprep.subr.bf16.mxu0 0
    %815 = vmatpush1.bf16.msra.mxu0 0
    %816 = vmatprep.subr.bf16.mxu0 0
    %817 = vmatpush1.bf16.msra.mxu0 0
    %818 = vmatprep.subr.bf16.mxu0 0
    %819 = vmatpush1.bf16.msra.mxu0 0
    %820 = vmatprep.subr.bf16.mxu0 0
    %821 = vmatpush1.bf16.msra.mxu0 0
    %822 = vmatprep.mubr.bf16.mxu0 0
    %823 = vmatmul.mubr.bf16.gmra.mrb[0].mxu0 %v788
    %v824 = vpop.f32.mrb[0].mxu0
    %v825 = vadd.f32 %v774, %v824
    %v826 = vpop.f32.mrb[0].mxu0
    %v827 = vpop.f32.mrb[0].mxu0
    %v828 = vadd.f32 %v774, %v827
    %v829 = vpop.f32.mrb[0].mxu0
    %830 = vdwg.mxu0
    %v831 = vmax.f32 %v825, 0.0
    %v832 = vmax.f32 %v828, 0.0
    %v833 = vpack.c.bf16 %v832, %v831
    %v834 = vlaneseq
    %v835 = vshrl.u32 %v834, 7
    %v836 = vsub.s32 0, %v835
    %v837 = vrot.slane %v87, %v836
    %v846 = vunpack.c.l.b16 %v72
    %v847 = vunpack.c.l.b16 %v73
    %v848 = vunpack.c.l.b16 %v74
    %v849 = vunpack.c.l.b16 %v75
    %v850 = vunpack.c.l.b16 %v76
    %v851 = vunpack.c.l.b16 %v77
    %v852 = vunpack.c.l.b16 %v78
    %v853 = vunpack.c.l.b16 %v79
    %v854 = vpack.c.b16 %v847, %v846
    %v855 = vpack.c.b16 %v849, %v848
    %v856 = vpack.c.b16 %v851, %v850
    %v857 = vpack.c.b16 %v853, %v852
    %vm862 = vcmask 523264
    %v864 = vsel %vm862, %v833, 0
    %866 = vmatprep.subr.bf16.mxu0 0
    %867 = vmatpush1.bf16.msra.mxu0 %v854
    %868 = vmatprep.subr.bf16.mxu0 0
    %869 = vmatpush1.bf16.msra.mxu0 %v855
    %870 = vmatprep.subr.bf16.mxu0 0
    %871 = vmatpush1.bf16.msra.mxu0 %v856
    %872 = vmatprep.subr.bf16.mxu0 0
    %873 = vmatpush1.bf16.msra.mxu0 %v857
    %874 = vmatprep.subr.bf16.mxu0 0
    %875 = vmatpush1.bf16.msra.mxu0 0
    %876 = vmatprep.subr.bf16.mxu0 0
    %877 = vmatpush1.bf16.msra.mxu0 0
    %878 = vmatprep.subr.bf16.mxu0 0
    %879 = vmatpush1.bf16.msra.mxu0 0
    %880 = vmatprep.subr.bf16.mxu0 0
    %881 = vmatpush1.bf16.msra.mxu0 0
    %882 = vmatprep.subr.bf16.mxu0 0
    %883 = vmatpush1.bf16.msra.mxu0 0
    %884 = vmatprep.subr.bf16.mxu0 0
    %885 = vmatpush1.bf16.msra.mxu0 0
    %886 = vmatprep.subr.bf16.mxu0 0
    %887 = vmatpush1.bf16.msra.mxu0 0
    %888 = vmatprep.subr.bf16.mxu0 0
    %889 = vmatpush1.bf16.msra.mxu0 0
    %890 = vmatprep.subr.bf16.mxu0 0
    %891 = vmatpush1.bf16.msra.mxu0 0
    %892 = vmatprep.subr.bf16.mxu0 0
    %893 = vmatpush1.bf16.msra.mxu0 0
    %894 = vmatprep.subr.bf16.mxu0 0
    %895 = vmatpush1.bf16.msra.mxu0 0
    %896 = vmatprep.subr.bf16.mxu0 0
    %897 = vmatpush1.bf16.msra.mxu0 0
    %898 = vmatprep.mubr.bf16.mxu0 0
    %899 = vmatmul.mubr.bf16.gmra.mrb[0].mxu0 %v864
    %v900 = vpop.f32.mrb[0].mxu0
    %v901 = vadd.f32 %v837, %v900
    %v902 = vpop.f32.mrb[0].mxu0
    %v903 = vpop.f32.mrb[0].mxu0
    %v904 = vadd.f32 %v837, %v903
    %v905 = vpop.f32.mrb[0].mxu0
    %906 = vdwg.mxu0
    %v907 = vadd.f32 %v768, %v901
    %v908 = vadd.f32 %v769, %v904
    %v909 = vsel %vm106, %v907, 0.0
    %910 = vadd.xlane.f32.xlu0 %v909
    %v911 = vpop.xlane.xlu0 %910
    %v912 = vsel %vm106, %v908, 0.0
    %913 = vadd.xlane.f32.xlu0 %v912
    %v914 = vpop.xlane.xlu0 %913
    %v915 = vmul.f32 %v911, %v737
    %v916 = vmul.f32 %v914, %v737
    %v917 = vsub.f32 %v907, %v915
    %v918 = vsub.f32 %v908, %v916
    %v919 = vmul.f32 %v917, %v917
    %v920 = vmul.f32 %v918, %v918
    %v921 = vsel %vm106, %v919, 0.0
    %922 = vadd.xlane.f32.xlu0 %v921
    %v923 = vpop.xlane.xlu0 %922
    %v924 = vsel %vm106, %v920, 0.0
    %925 = vadd.xlane.f32.xlu0 %v924
    %v926 = vpop.xlane.xlu0 %925
    %v927 = vmul.f32 %v923, %v737
    %v928 = vmul.f32 %v926, %v737
    %v929 = vadd.f32 %v927, 1e-05
    %v930 = vadd.f32 %v928, 1e-05
    %v931 = vrsqrt.pop %v929
    %v932 = vrsqrt.pop %v930
    %v933 = vmul.f32 %v917, %v931
    %v934 = vmul.f32 %v918, %v932
    %v935 = vlaneseq
    %v936 = vshrl.u32 %v935, 7
    %v937 = vsub.s32 0, %v936
    %v938 = vrot.slane %v88, %v937
    %v939 = vmul.f32 %v933, %v938
    %v940 = vmul.f32 %v934, %v938
    %v941 = vlaneseq
    %v942 = vshrl.u32 %v941, 7
    %v943 = vsub.s32 0, %v942
    %v944 = vrot.slane %v89, %v943
    %v945 = vadd.f32 %v939, %v944
    %v946 = vadd.f32 %v940, %v944
    %947 = vst.msk [vmem:[#allocation8] sm:$0xff] %vm106, %v945
    %948 = vst.msk [vmem:[#allocation8 + $0x8] sm:$0xff] %vm106, %v946
    // Predicated region
    $region26: #{tpu_custom_call.1} parent=1 // pred_check
      _
    $region27: #{tpu_custom_call.1} parent=1 // pred_check_branch
      %950 = sbr.rel (0) target = $region29
    $region28: #{tpu_custom_call.1} parent=1 // pred_region
      %s952 = ssub.s32 256, 256
      %953 = vsyncadd [#allocation4], %s952
      %s954 = sshll.u32 [#allocation8], 4
      %s955 = int_to_ptr.vmem [resolvable:$true] %s954
      %960 = dma.vmem_to_hbm [thread:$0]  %s955, 256, %s3, [#allocation4], 128, 128, 8
    $region29: #{tpu_custom_call.1} parent=1 // pred_fallthru
      _
    // Predicated region
    $region30: #{tpu_custom_call.1} parent=1 // pred_check
      _
    $region31: #{tpu_custom_call.1} parent=1 // pred_check_branch
      %962 = sbr.rel (0) target = $region33
    $region32: #{tpu_custom_call.1} parent=1 // pred_region
      %963 = dma.done [#allocation4], 256
    $region33: #{tpu_custom_call.1} parent=1 // pred_fallthru
      _
    %964 = vsyncpa [#allocation3], 1
    %965 = vsyncpa [#allocation6], 1
    %966 = vsyncpa [#allocation4], 1

</llo_original>
